<compile_context>
chip_gen: v7x
topology: tpu7x:2x2x1
jax: 0.10.0
libtpu: 0.0.40
codegen_flags: <defaults>
</compile_context>

<pallas_src>
import functools

import jax
import jax.numpy as jnp
from jax.experimental import pallas as pl
from jax.experimental.pallas import tpu as pltpu


def _round_up(n, m):
    return ((n + m - 1) // m) * m


def _adversary_kernel(x_ref, p_ref, out_ref, *, in_p, hid_p, hid_dim):
    """Fused MLP (2 ReLU'd linears + 2-class classifier + log_softmax).

    x_ref:   (TB, in_p)  f32 batch tile (ones feature at column `in_dim`).
    p_ref:   (in_p + hid_p + 8, hid_p) f32 packed parameter slab:
               rows [0, in_p)            : layer1 weight (+ bias row)
               rows [in_p, in_p+hid_p)   : layer2 weight (+ bias row)
               row  in_p+hid_p           : classifier difference row (+ bias)
    out_ref: (TB, 2) f32 log-probabilities.
    """
    x = x_ref[...]                                      # (TB, IN_P)
    w1 = p_ref[0:in_p, :]                               # (IN_P, HID_P)
    w2 = p_ref[in_p:in_p + hid_p, :]                    # (HID_P, HID_P)
    wd = p_ref[in_p + hid_p:in_p + hid_p + 1, :]        # (1, HID_P)

    # layer1 + ReLU (bias folded via the ones column of x)
    h1 = jnp.maximum(jnp.dot(x, w1, preferred_element_type=jnp.float32), 0.0)

    # insert a ones feature at column `hid_dim` (padded region) -> folds the
    # next layer's bias into its weight matrix.
    lane = jax.lax.broadcasted_iota(jnp.int32, h1.shape, 1)
    ones_col = lane == hid_dim
    h1 = jnp.where(ones_col, 1.0, h1)

    # layer2 + ReLU
    h2 = jnp.maximum(jnp.dot(h1, w2, preferred_element_type=jnp.float32), 0.0)
    h2 = jnp.where(ones_col, 1.0, h2)

    # 2-class classifier + log_softmax, closed form:
    #   d = logit1 - logit0 ; out = [-softplus(d), -softplus(-d)]
    d = jnp.sum(h2 * wd, axis=-1, keepdims=True)        # (TB, 1)
    sp_pos = jnp.maximum(d, 0.0) + jnp.log(1.0 + jnp.exp(-jnp.abs(d)))
    sp_neg = sp_pos - d                                 # softplus(-d)

    cls_lane = jax.lax.broadcasted_iota(jnp.int32, out_ref.shape, 1)
    out_ref[...] = jnp.where(cls_lane == 0, -sp_pos, -sp_neg).astype(out_ref.dtype)


def pack_params(params, in_dim, hid_dim):
    """Pack (w1, b1, w2, b2, wc, bc) into one zero-padded VMEM slab."""
    w1, b1, w2, b2, wc, bc = params
    in_p = _round_up(in_dim + 1, 64)     # +1 slot for the ones/bias feature
    hid_p = _round_up(hid_dim + 1, 64)
    rows = in_p + hid_p + 8              # 8-row aligned classifier section

    slab = jnp.zeros((rows, hid_p), jnp.float32)
    # layer1: weight + bias row (activated by the ones column of x)
    slab = slab.at[0:in_dim, 0:hid_dim].set(w1)
    slab = slab.at[in_dim, 0:hid_dim].set(b1[0])
    # layer2: weight + bias row (activated by the in-kernel ones column)
    slab = slab.at[in_p:in_p + hid_dim, 0:hid_dim].set(w2)
    slab = slab.at[in_p + hid_dim, 0:hid_dim].set(b2[0])
    # classifier difference row: wc[:,1]-wc[:,0], bias diff at column hid_dim
    slab = slab.at[in_p + hid_p, 0:hid_dim].set(wc[:, 1] - wc[:, 0])
    slab = slab.at[in_p + hid_p, hid_dim].set(bc[0, 1] - bc[0, 0])
    return slab, in_p, hid_p


def adversary_forward(x, params, block_b=2048):
    w1 = params[0]
    in_dim, hid_dim = w1.shape
    B = x.shape[0]

    slab, in_p, hid_p = pack_params(params, in_dim, hid_dim)

    tb = min(block_b, _round_up(B, 8))
    b_pad = _round_up(B, tb)

    # zero-pad x to (b_pad, in_p) and add the constant ones feature that
    # folds layer1's bias into its weight matrix.
    x_pad = jnp.zeros((b_pad, in_p), jnp.float32)
    x_pad = x_pad.at[:B, :in_dim].set(x.astype(jnp.float32))
    x_pad = x_pad.at[:, in_dim].set(1.0)

    kernel = functools.partial(
        _adversary_kernel, in_p=in_p, hid_p=hid_p, hid_dim=hid_dim)

    out = pl.pallas_call(
        kernel,
        out_shape=jax.ShapeDtypeStruct((b_pad, 2), jnp.float32),
        grid=(pl.cdiv(b_pad, tb),),
        in_specs=[
            pl.BlockSpec((tb, in_p), lambda i: (i, 0)),      # streamed batch
            pl.BlockSpec(slab.shape, lambda i: (0, 0)),      # resident params
        ],
        out_specs=pl.BlockSpec((tb, 2), lambda i: (i, 0)),
        compiler_params=pltpu.CompilerParams(
            dimension_semantics=("parallel",)),
    )(x_pad, slab)
    return out[:B]


def init_params(key, in_dim=60, hid_dim=50, n_cls=2):
    k1, k2, k3, k4, k5, k6 = jax.random.split(key, 6)
    # Weights stored pre-transposed as [in, out]; biases as [1, out].
    w1 = jax.random.normal(k1, (in_dim, hid_dim), jnp.float32) * 0.1
    b1 = jax.random.normal(k2, (1, hid_dim), jnp.float32) * 0.1
    w2 = jax.random.normal(k3, (hid_dim, hid_dim), jnp.float32) * 0.1
    b2 = jax.random.normal(k4, (1, hid_dim), jnp.float32) * 0.1
    wc = jax.random.normal(k5, (hid_dim, n_cls), jnp.float32) * 0.1
    bc = jax.random.normal(k6, (1, n_cls), jnp.float32) * 0.1
    return (w1, b1, w2, b2, wc, bc)


def reference_forward(x, params):
    w1, b1, w2, b2, wc, bc = params
    h1 = jnp.maximum(x @ w1 + b1, 0.0)
    h2 = jnp.maximum(h1 @ w2 + b2, 0.0)
    logits = h2 @ wc + bc
    return jax.nn.log_softmax(logits, axis=1)


if __name__ == "__main__":
    key = jax.random.PRNGKey(0)
    kx, kp, kx2 = jax.random.split(key, 3)

    IN_DIM, HID_DIM = 60, 50
    params = init_params(kp, IN_DIM, HID_DIM, 2)

    # Small batch (single grid step).
    B = 8
    x = jax.random.normal(kx, (B, IN_DIM), jnp.float32)
    out = jax.block_until_ready(adversary_forward(x, params))
    ref = reference_forward(x, params)
    assert out.shape == (B, 2)
    assert jnp.allclose(out, ref, atol=1e-4, rtol=1e-4)

    # Larger non-multiple batch: exercises the batch grid, pipelining and
    # padding/slicing path.
    B2 = 300
    x2 = jax.random.normal(kx2, (B2, IN_DIM), jnp.float32)
    out2 = jax.block_until_ready(adversary_forward(x2, params, block_b=128))
    ref2 = reference_forward(x2, params)
    assert out2.shape == (B2, 2)
    assert jnp.allclose(out2, ref2, atol=1e-4, rtol=1e-4)

    print("KERNEL_OK")
</pallas_src>

<mosaic_0001>
module attributes {stable_mosaic.version = 11 : i64} {
  func.func @_adversary_kernel(%arg0: i32, %arg1: memref<8x64xf32, #tpu.memory_space<vmem>>, %arg2: memref<136x64xf32, #tpu.memory_space<vmem>>, %arg3: memref<8x2xf32, #tpu.memory_space<vmem>>) attributes {dimension_semantics = [#tpu.dimension_semantics<parallel>], iteration_bounds = array<i64: 1>, scalar_prefetch = 0 : i64, scratch_operands = 0 : i64, tpu.core_type = #tpu.core_type<tc>, window_params = [{transform_indices = @transform_0, window_bounds = array<i64: 8, 64>}, {pipeline_mode = #tpu.pipeline_mode<synchronous>, transform_indices = @transform_1, window_bounds = array<i64: 136, 64>}, {transform_indices = @transform_2, window_bounds = array<i64: 8, 2>}]} {
    %c0 = arith.constant 0 : index
    %c0_0 = arith.constant 0 : index
    %0 = vector.load %arg1[%c0, %c0_0] : memref<8x64xf32, #tpu.memory_space<vmem>>, vector<8x64xf32>
    %c0_1 = arith.constant 0 : index
    %c0_2 = arith.constant 0 : index
    %1 = vector.load %arg2[%c0_1, %c0_2] : memref<136x64xf32, #tpu.memory_space<vmem>>, vector<64x64xf32>
    %c64 = arith.constant 64 : index
    %c0_3 = arith.constant 0 : index
    %2 = vector.load %arg2[%c64, %c0_3] : memref<136x64xf32, #tpu.memory_space<vmem>>, vector<64x64xf32>
    %c128 = arith.constant 128 : index
    %c0_4 = arith.constant 0 : index
    %3 = vector.load %arg2[%c128, %c0_4] : memref<136x64xf32, #tpu.memory_space<vmem>>, vector<1x64xf32>
    %cst = arith.constant dense<0.000000e+00> : vector<8x64xf32>
    %4 = tpu.matmul %0, %1, %cst {dimension_numbers = #tpu.dot_dimension_numbers<[1], [0], [0], [1], [0, 0, 1, 1], [], []>} : vector<8x64xf32>, vector<64x64xf32>, vector<8x64xf32> -> vector<8x64xf32>
    %cst_5 = arith.constant 0.000000e+00 : f32
    %5 = vector.broadcast %cst_5 : f32 to vector<8x64xf32>
    %6 = arith.maximumf %4, %5 : vector<8x64xf32>
    %7 = tpu.iota {dimensions = array<i32: 1>} : vector<8x64xi32>
    %c50_i32 = arith.constant 50 : i32
    %8 = vector.broadcast %c50_i32 : i32 to vector<8x64xi32>
    %9 = arith.cmpi eq, %7, %8 : vector<8x64xi32>
    %cst_6 = arith.constant 1.000000e+00 : f32
    %10 = vector.broadcast %cst_6 : f32 to vector<8x64xf32>
    %11 = arith.select %9, %10, %6 : vector<8x64xi1>, vector<8x64xf32>
    %cst_7 = arith.constant dense<0.000000e+00> : vector<8x64xf32>
    %12 = tpu.matmul %11, %2, %cst_7 {dimension_numbers = #tpu.dot_dimension_numbers<[1], [0], [0], [1], [0, 0, 1, 1], [], []>} : vector<8x64xf32>, vector<64x64xf32>, vector<8x64xf32> -> vector<8x64xf32>
    %cst_8 = arith.constant 0.000000e+00 : f32
    %13 = vector.broadcast %cst_8 : f32 to vector<8x64xf32>
    %14 = arith.maximumf %12, %13 : vector<8x64xf32>
    %cst_9 = arith.constant 1.000000e+00 : f32
    %15 = vector.broadcast %cst_9 : f32 to vector<8x64xf32>
    %16 = arith.select %9, %15, %14 : vector<8x64xi1>, vector<8x64xf32>
    %17 = vector.broadcast %3 : vector<1x64xf32> to vector<8x64xf32>
    %18 = arith.mulf %16, %17 : vector<8x64xf32>
    %cst_10 = arith.constant dense<0.000000e+00> : vector<8xf32>
    %19 = vector.multi_reduction <add>, %18, %cst_10 [1] : vector<8x64xf32> to vector<8xf32>
    %20 = vector.shape_cast %19 : vector<8xf32> to vector<8x1xf32>
    %cst_11 = arith.constant 0.000000e+00 : f32
    %21 = vector.broadcast %cst_11 : f32 to vector<8x1xf32>
    %22 = arith.maximumf %20, %21 : vector<8x1xf32>
    %23 = math.absf %20 : vector<8x1xf32>
    %cst_12 = arith.constant 0.000000e+00 : f32
    %24 = vector.broadcast %cst_12 : f32 to vector<8x1xf32>
    %25 = arith.subf %24, %23 : vector<8x1xf32>
    %26 = math.exp %25 : vector<8x1xf32>
    %cst_13 = arith.constant 1.000000e+00 : f32
    %27 = vector.broadcast %cst_13 : f32 to vector<8x1xf32>
    %28 = arith.addf %27, %26 : vector<8x1xf32>
    %29 = math.log %28 : vector<8x1xf32>
    %30 = arith.addf %22, %29 : vector<8x1xf32>
    %31 = arith.subf %30, %20 : vector<8x1xf32>
    %32 = tpu.iota {dimensions = array<i32: 1>} : vector<8x2xi32>
    %c0_i32 = arith.constant 0 : i32
    %33 = vector.broadcast %c0_i32 : i32 to vector<8x2xi32>
    %34 = arith.cmpi eq, %32, %33 : vector<8x2xi32>
    %cst_14 = arith.constant 0.000000e+00 : f32
    %35 = vector.broadcast %cst_14 : f32 to vector<8x1xf32>
    %36 = arith.subf %35, %30 : vector<8x1xf32>
    %cst_15 = arith.constant 0.000000e+00 : f32
    %37 = vector.broadcast %cst_15 : f32 to vector<8x1xf32>
    %38 = arith.subf %37, %31 : vector<8x1xf32>
    %39 = vector.shape_cast %36 : vector<8x1xf32> to vector<8x1xf32>
    %40 = vector.broadcast %39 : vector<8x1xf32> to vector<8x2xf32>
    %41 = vector.shape_cast %38 : vector<8x1xf32> to vector<8x1xf32>
    %42 = vector.broadcast %41 : vector<8x1xf32> to vector<8x2xf32>
    %43 = arith.select %34, %40, %42 : vector<8x2xi1>, vector<8x2xf32>
    %c0_16 = arith.constant 0 : index
    %c0_17 = arith.constant 0 : index
    %44 = vector.load %arg3[%c0_16, %c0_17] : memref<8x2xf32, #tpu.memory_space<vmem>>, vector<8x2xf32>
    tpu.vector_store %arg3[%c0_16, %c0_17], %43 {strides = array<i32>} : memref<8x2xf32, #tpu.memory_space<vmem>>, vector<8x2xf32>,
    return
  }
  func.func @transform_0(%arg0: i32) -> (i32, i32) {
    %c0_i32 = arith.constant 0 : i32
    %c0_i32_0 = arith.constant 0 : i32
    return %arg0, %c0_i32 : i32, i32
  }
  func.func @transform_1(%arg0: i32) -> (i32, i32) {
    %c0_i32 = arith.constant 0 : i32
    %c0_i32_0 = arith.constant 0 : i32
    %c0_i32_1 = arith.constant 0 : i32
    return %c0_i32, %c0_i32_0 : i32, i32
  }
  func.func @transform_2(%arg0: i32) -> (i32, i32) {
    %c0_i32 = arith.constant 0 : i32
    %c0_i32_0 = arith.constant 0 : i32
    return %arg0, %c0_i32 : i32, i32
  }
}

</mosaic_0001>

<llo_original>
// kernel: tpu_custom_call.1
$region0: #{tpu_custom_call.1}
  #allocation0 [shape = 'u32[]', space=smem, size = 0x4, offset = 0x4, fixed_abs, tag = 'smem constant byte address 0x4 - core index']
  #allocation1 [shape = 'u32[144,128]{1,0:T(1,128)}', space=vmem, size = 0x12000, scoped, tag = 'internal scratch']
  %s0 = inlined_call_operand.vmem [shape: f32[8,64], index: 0, kind: input, shape index: {}]
  %s1 = inlined_call_operand.vmem [shape: f32[136,64], index: 1, kind: input, shape index: {}]
  %s2 = inlined_call_operand.vmem [shape: f32[8,2], index: 2, kind: output, shape index: {}]
  %s3 = sld [smem:[#allocation0]]
  $region18: #{tpu_custom_call.1} parent=0
    _
  %s5 = ssub.s32 1, %s3
  %s6 = scalar_select 0, %s5, %s3
  // Predicated region
  $region2: #{tpu_custom_call.1} parent=0 // pred_check
    _
  $region3: #{tpu_custom_call.1} parent=0 // pred_check_branch
    %8 = sbr.rel (0) target = $region5
  $region4: #{tpu_custom_call.1} parent=0 // pred_region
    _
  $region5: #{tpu_custom_call.1} parent=0 // pred_fallthru
    _
  // Predicated region
  $region6: #{tpu_custom_call.1} parent=0 // pred_check
    _
  $region7: #{tpu_custom_call.1} parent=0 // pred_check_branch
    %10 = sbr.rel (0) target = $region9
  $region8: #{tpu_custom_call.1} parent=0 // pred_region
    _
  $region9: #{tpu_custom_call.1} parent=0 // pred_fallthru
    _
  %v11 = vld [vmem:[%s0] sm:$0xff]
  %v12 = vld [vmem:[%s1] sm:$0xff]
  %v13 = vld [vmem:[%s1 + $0x8] sm:$0xff]
  %v14 = vld [vmem:[%s1 + $0x10] sm:$0xff]
  %v15 = vld [vmem:[%s1 + $0x18] sm:$0xff]
  %v16 = vld [vmem:[%s1 + $0x20] sm:$0xff]
  %v17 = vld [vmem:[%s1 + $0x28] sm:$0xff]
  %v18 = vld [vmem:[%s1 + $0x30] sm:$0xff]
  %v19 = vld [vmem:[%s1 + $0x38] sm:$0xff]
  %v20 = vld [vmem:[%s1 + $0x40] sm:$0xff]
  %v21 = vld [vmem:[%s1 + $0x48] sm:$0xff]
  %v22 = vld [vmem:[%s1 + $0x50] sm:$0xff]
  %v23 = vld [vmem:[%s1 + $0x58] sm:$0xff]
  %v24 = vld [vmem:[%s1 + $0x60] sm:$0xff]
  %v25 = vld [vmem:[%s1 + $0x68] sm:$0xff]
  %v26 = vld [vmem:[%s1 + $0x70] sm:$0xff]
  %v27 = vld [vmem:[%s1 + $0x78] sm:$0xff]
  %v28 = vld [vmem:[%s1 + $0x80] sm:$0x1]
  %vm29 = vcmask 523264
  %v31 = vsel %vm29, %v11, 0
  %33 = vmatprep.subr.mxu0 0.0
  %34 = vmatpush1.msra.mxu0 %v12
  %35 = vmatprep.subr.mxu0 0.0
  %36 = vmatpush1.msra.mxu0 %v13
  %37 = vmatprep.subr.mxu0 0.0
  %38 = vmatpush1.msra.mxu0 %v14
  %39 = vmatprep.subr.mxu0 0.0
  %40 = vmatpush1.msra.mxu0 %v15
  %41 = vmatprep.subr.mxu0 0.0
  %42 = vmatpush1.msra.mxu0 %v16
  %43 = vmatprep.subr.mxu0 0.0
  %44 = vmatpush1.msra.mxu0 %v17
  %45 = vmatprep.subr.mxu0 0.0
  %46 = vmatpush1.msra.mxu0 %v18
  %47 = vmatprep.subr.mxu0 0.0
  %48 = vmatpush1.msra.mxu0 %v19
  %49 = vmatprep.subr.mxu0 0.0
  %50 = vmatpush1.msra.mxu0 0.0
  %51 = vmatprep.subr.mxu0 0.0
  %52 = vmatpush1.msra.mxu0 0.0
  %53 = vmatprep.subr.mxu0 0.0
  %54 = vmatpush1.msra.mxu0 0.0
  %55 = vmatprep.subr.mxu0 0.0
  %56 = vmatpush1.msra.mxu0 0.0
  %57 = vmatprep.subr.mxu0 0.0
  %58 = vmatpush1.msra.mxu0 0.0
  %59 = vmatprep.subr.mxu0 0.0
  %60 = vmatpush1.msra.mxu0 0.0
  %61 = vmatprep.subr.mxu0 0.0
  %62 = vmatpush1.msra.mxu0 0.0
  %63 = vmatprep.subr.mxu0 0.0
  %64 = vmatpush1.msra.mxu0 0.0
  %65 = vmatprep.subr.mxu0 0.0
  %66 = vmatpush1.msra.mxu0 0.0
  %67 = vmatprep.subr.mxu0 0.0
  %68 = vmatpush1.msra.mxu0 0.0
  %69 = vmatprep.subr.mxu0 0.0
  %70 = vmatpush1.msra.mxu0 0.0
  %71 = vmatprep.subr.mxu0 0.0
  %72 = vmatpush1.msra.mxu0 0.0
  %73 = vmatprep.subr.mxu0 0.0
  %74 = vmatpush1.msra.mxu0 0.0
  %75 = vmatprep.subr.mxu0 0.0
  %76 = vmatpush1.msra.mxu0 0.0
  %77 = vmatprep.subr.mxu0 0.0
  %78 = vmatpush1.msra.mxu0 0.0
  %79 = vmatprep.subr.mxu0 0.0
  %80 = vmatpush1.msra.mxu0 0.0
  %81 = vmatprep.subr.mxu0 0.0
  %82 = vmatpush1.msra.mxu0 0.0
  %83 = vmatprep.subr.mxu0 0.0
  %84 = vmatpush1.msra.mxu0 0.0
  %85 = vmatprep.subr.mxu0 0.0
  %86 = vmatpush1.msra.mxu0 0.0
  %87 = vmatprep.subr.mxu0 0.0
  %88 = vmatpush1.msra.mxu0 0.0
  %89 = vmatprep.subr.mxu0 0.0
  %90 = vmatpush1.msra.mxu0 0.0
  %91 = vmatprep.subr.mxu0 0.0
  %92 = vmatpush1.msra.mxu0 0.0
  %93 = vmatprep.subr.mxu0 0.0
  %94 = vmatpush1.msra.mxu0 0.0
  %95 = vmatprep.subr.mxu0 0.0
  %96 = vmatpush1.msra.mxu0 0.0
  %97 = vmatprep.mubr.f32.mxu0 0.0
  %98 = vmatmul.mubr.f32.gmra.mrb[0].mxu0 %v31
  %v99 = vpop.f32.mrb[0].mxu0
  %v100 = vadd.f32 0.0, %v99
  %v101 = vpop.f32.mrb[0].mxu0
  %102 = vdwg.mxu0
  %v103 = vmax.f32 %v100, 0.0
  %v104 = vlaneseq
  %v105 = vand.u32 %v104, 127
  %vm106 = vcmp.eq.s32.totalorder %v105, 50
  %v107 = vsel %vm106, 1.0, %v103
  %v109 = vsel %vm29, %v107, 0
  %111 = vmatprep.subr.mxu0 0.0
  %112 = vmatpush1.msra.mxu0 %v20
  %113 = vmatprep.subr.mxu0 0.0
  %114 = vmatpush1.msra.mxu0 %v21
  %115 = vmatprep.subr.mxu0 0.0
  %116 = vmatpush1.msra.mxu0 %v22
  %117 = vmatprep.subr.mxu0 0.0
  %118 = vmatpush1.msra.mxu0 %v23
  %119 = vmatprep.subr.mxu0 0.0
  %120 = vmatpush1.msra.mxu0 %v24
  %121 = vmatprep.subr.mxu0 0.0
  %122 = vmatpush1.msra.mxu0 %v25
  %123 = vmatprep.subr.mxu0 0.0
  %124 = vmatpush1.msra.mxu0 %v26
  %125 = vmatprep.subr.mxu0 0.0
  %126 = vmatpush1.msra.mxu0 %v27
  %127 = vmatprep.subr.mxu0 0.0
  %128 = vmatpush1.msra.mxu0 0.0
  %129 = vmatprep.subr.mxu0 0.0
  %130 = vmatpush1.msra.mxu0 0.0
  %131 = vmatprep.subr.mxu0 0.0
  %132 = vmatpush1.msra.mxu0 0.0
  %133 = vmatprep.subr.mxu0 0.0
  %134 = vmatpush1.msra.mxu0 0.0
  %135 = vmatprep.subr.mxu0 0.0
  %136 = vmatpush1.msra.mxu0 0.0
  %137 = vmatprep.subr.mxu0 0.0
  %138 = vmatpush1.msra.mxu0 0.0
  %139 = vmatprep.subr.mxu0 0.0
  %140 = vmatpush1.msra.mxu0 0.0
  %141 = vmatprep.subr.mxu0 0.0
  %142 = vmatpush1.msra.mxu0 0.0
  %143 = vmatprep.subr.mxu0 0.0
  %144 = vmatpush1.msra.mxu0 0.0
  %145 = vmatprep.subr.mxu0 0.0
  %146 = vmatpush1.msra.mxu0 0.0
  %147 = vmatprep.subr.mxu0 0.0
  %148 = vmatpush1.msra.mxu0 0.0
  %149 = vmatprep.subr.mxu0 0.0
  %150 = vmatpush1.msra.mxu0 0.0
  %151 = vmatprep.subr.mxu0 0.0
  %152 = vmatpush1.msra.mxu0 0.0
  %153 = vmatprep.subr.mxu0 0.0
  %154 = vmatpush1.msra.mxu0 0.0
  %155 = vmatprep.subr.mxu0 0.0
  %156 = vmatpush1.msra.mxu0 0.0
  %157 = vmatprep.subr.mxu0 0.0
  %158 = vmatpush1.msra.mxu0 0.0
  %159 = vmatprep.subr.mxu0 0.0
  %160 = vmatpush1.msra.mxu0 0.0
  %161 = vmatprep.subr.mxu0 0.0
  %162 = vmatpush1.msra.mxu0 0.0
  %163 = vmatprep.subr.mxu0 0.0
  %164 = vmatpush1.msra.mxu0 0.0
  %165 = vmatprep.subr.mxu0 0.0
  %166 = vmatpush1.msra.mxu0 0.0
  %167 = vmatprep.subr.mxu0 0.0
  %168 = vmatpush1.msra.mxu0 0.0
  %169 = vmatprep.subr.mxu0 0.0
  %170 = vmatpush1.msra.mxu0 0.0
  %171 = vmatprep.subr.mxu0 0.0
  %172 = vmatpush1.msra.mxu0 0.0
  %173 = vmatprep.subr.mxu0 0.0
  %174 = vmatpush1.msra.mxu0 0.0
  %175 = vmatprep.mubr.f32.mxu0 0.0
  %176 = vmatmul.mubr.f32.gmra.mrb[0].mxu0 %v109
  %v177 = vpop.f32.mrb[0].mxu0
  %v178 = vadd.f32 0.0, %v177
  %v179 = vpop.f32.mrb[0].mxu0
  %180 = vdwg.mxu0
  %v181 = vmax.f32 %v178, 0.0
  %v182 = vsel %vm106, 1.0, %v181
  %v183 = vlaneseq
  %v184 = vshrl.u32 %v183, 7
  %v185 = vsub.s32 0, %v184
  %v186 = vrot.slane %v28, %v185
  %v187 = vmul.f32 %v182, %v186
  %v188 = vsel %vm29, %v187, 0.0
  %189 = vadd.xlane.f32.xlu0 %v188
  %v190 = vpop.xlane.xlu0 %189
  %v191 = vmax.f32 %v190, 0.0
  %v192 = vand.u32 2147483647, %v190
  %v193 = vsub.f32 0.0, %v192
  %v194 = vmul.f32 %v193, 1.442695
  %v195 = vpow.pop %v194
  %v196 = vadd.f32 %v195, 1.0
  %v197 = vlog2.pop %v196
  %v198 = vmul.f32 %v197, 0.6931472
  %v199 = vadd.f32 %v191, %v198
  %v200 = vsub.f32 %v199, %v190
  %vm201 = vcmp.eq.s32.totalorder %v105, 0
  %v202 = vsub.f32 0.0, %v199
  %v203 = vsub.f32 0.0, %v200
  %v204 = vsel %vm201, %v202, %v203
  %vm205 = vcmask 15360
  %206 = vst.msk [vmem:[%s2] sm:$0xff] %vm205, %v204
  // Predicated region
  $region10: #{tpu_custom_call.1} parent=0 // pred_check
    _
  $region11: #{tpu_custom_call.1} parent=0 // pred_check_branch
    %208 = sbr.rel (0) target = $region13
  $region12: #{tpu_custom_call.1} parent=0 // pred_region
    _
  $region13: #{tpu_custom_call.1} parent=0 // pred_fallthru
    _
  // Predicated region
  $region14: #{tpu_custom_call.1} parent=0 // pred_check
    _
  $region15: #{tpu_custom_call.1} parent=0 // pred_check_branch
    %210 = sbr.rel (0) target = $region17
  $region16: #{tpu_custom_call.1} parent=0 // pred_region
    _
  $region17: #{tpu_custom_call.1} parent=0 // pred_fallthru
    _

</llo_original>
